<compile_context>
chip_gen: v7x
topology: tpu7x:2x2x1
jax: 0.10.0
libtpu: 0.0.40
codegen_flags: <defaults>
</compile_context>

<pallas_src>
import functools

import jax
import jax.numpy as jnp
from jax.experimental import pallas as pl
from jax.experimental.pallas import tpu as pltpu

GAMMA = 1.5
ALPHA = 0.25
LANES = 128
MAX_TILE_R = 2048                    # (2048,128) f32 block = 1 MiB per input
VMEM_LIMIT_BYTES = 32 * 1024 * 1024  # fits v5e/v6e/v7x scoped VMEM comfortably


def _modulating(m, gamma):
    # m = 1 - p_t >= 0.  Specialized powers avoid jnp.power's log+exp.
    if gamma == 1.5:
        return m * jnp.sqrt(m)
    if gamma == 2.0:
        return m * m
    if gamma == 1.0:
        return m
    if gamma == 0.0:
        return jnp.ones_like(m)
    return jnp.power(m, gamma)


def _focal_loss_kernel(pred_ref, true_ref, out_ref, *, gamma, alpha,
                       rows, tile_r, steps, ragged):
    c = pl.program_id(0)   # core slice (leading "parallel" axis)
    i = pl.program_id(1)   # streaming / reduction axis ("arbitrary")

    # The (8,128) output block is resident across the reduction axis and acts
    # as this slice's vreg-shaped partial-sum accumulator.
    @pl.when(i == 0)
    def _():
        out_ref[...] = jnp.zeros_like(out_ref)

    x = pred_ref[...].astype(jnp.float32)
    z = true_ref[...].astype(jnp.float32)

    # One exp per element, shared by the stable BCE and the sigmoid.
    e = jnp.exp(-jnp.abs(x))
    # Numerically stable BCEWithLogits (reduction='none'):
    #   max(x, 0) - x*z + log1p(exp(-|x|))
    bce = jnp.maximum(x, 0.0) - x * z + jnp.log1p(e)
    # sigmoid from the same exp: x>=0 -> 1/(1+e), x<0 -> e/(1+e)
    inv = 1.0 / (1.0 + e)
    p = jnp.where(x >= 0.0, inv, e * inv)

    # Strength-reduced focal algebra:
    #   m            = 1 - p_t           = p + z*(1 - 2p)     (>= 0 for z,p in [0,1])
    #   alpha_factor = z*a + (1-z)*(1-a) = (1-a) + z*(2a - 1)
    m = jnp.maximum(p + z * (1.0 - 2.0 * p), 0.0)   # single max = ulp guard for sqrt
    alpha_factor = (1.0 - alpha) + z * (2.0 * alpha - 1.0)
    loss = bce * alpha_factor * _modulating(m, gamma)

    def _accum(vals):
        # Collapse row-groups of 8 with cheap VPU adds; the single cross-lane
        # reduce to a scalar happens once, in the wrapper.
        out_ref[...] += jnp.sum(vals.reshape(tile_r // 8, 8, LANES), axis=0)

    if not ragged:
        # Static fast path: every block tiles the array exactly, no mask ever.
        _accum(loss)
    else:
        # Only trailing block(s) can contain invalid rows (ragged edge or dead
        # blocks when work does not split evenly across cores).  Gate the mask
        # so full blocks pay zero extra VPU work.  The mask is applied AFTER
        # the loss math so garbage in the invalid rows cannot propagate.
        block_start = (c * steps + i) * tile_r

        @pl.when(block_start + tile_r <= rows)
        def _():
            _accum(loss)

        @pl.when(block_start + tile_r > rows)
        def _():
            row_ids = jax.lax.broadcasted_iota(jnp.int32, (tile_r, LANES), 0)
            _accum(jnp.where(row_ids + block_start < rows, loss, 0.0))


def _focal_terms(x, z, gamma, alpha):
    """Pure-jnp elementwise focal loss (reference + <128-element tail epilogue)."""
    x = x.astype(jnp.float32)
    z = z.astype(jnp.float32)
    bce = jnp.maximum(x, 0.0) - x * z + jnp.log1p(jnp.exp(-jnp.abs(x)))
    p = jax.nn.sigmoid(x)
    p_t = z * p + (1.0 - z) * (1.0 - p)
    af = z * alpha + (1.0 - z) * (1.0 - alpha)
    mf = (1.0 - p_t) ** gamma
    return bce * af * mf


def _num_tensorcores_per_chip():
    # v7x has 2 TensorCores per chip; v5e/v6e have 1.  Conservative fallback.
    try:
        kind = (jax.devices()[0].device_kind or "").lower()
    except Exception:
        return 1
    return 2 if ("v7" in kind or "tpu7" in kind) else 1


def focal_loss(pred, true, gamma=GAMMA, alpha=ALPHA, reduction="mean"):
    """Focal loss with BCEWithLogits base loss. Returns scalar f32 ('mean'/'sum')."""
    assert pred.shape == true.shape
    if true.dtype != pred.dtype:
        true = true.astype(pred.dtype)

    n = pred.size
    flat_pred = pred.reshape(-1)
    flat_true = true.reshape(-1)

    rows = n // LANES
    rem = n - rows * LANES

    # <128-element flat tail handled in plain jnp (avoids padding/copying the
    # whole tensor just to make n a multiple of 128).
    if rem:
        tail = jnp.sum(_focal_terms(flat_pred[rows * LANES:],
                                    flat_true[rows * LANES:], gamma, alpha))
    else:
        tail = jnp.float32(0.0)

    if rows == 0:
        total = tail
    else:
        # NOTE: only when rem != 0 does this prefix slice cost an extra copy of
        # the aligned prefix; aligned inputs (the common case) reshape for free.
        if rem:
            flat_pred = flat_pred[: rows * LANES]
            flat_true = flat_true[: rows * LANES]
        pred2 = flat_pred.reshape(rows, LANES)
        true2 = flat_true.reshape(rows, LANES)

        # sublane multiple for the input dtype packing (f32:8, bf16:16, 8-bit:32)
        itemsize = jnp.dtype(pred.dtype).itemsize
        sub = {4: 8, 2: 16, 1: 32}.get(itemsize, 8)

        num_cores = _num_tensorcores_per_chip()
        tile_r = min(MAX_TILE_R, -(-rows // sub) * sub)   # round_up(rows, sub)
        total_blocks = -(-rows // tile_r)
        steps = -(-total_blocks // num_cores)
        last_block = total_blocks - 1
        ragged = (num_cores * steps * tile_r != rows)

        kernel = functools.partial(
            _focal_loss_kernel, gamma=gamma, alpha=alpha,
            rows=rows, tile_r=tile_r, steps=steps, ragged=ragged)

        def in_map(c, i):
            # Clamp so "dead" trailing blocks (when work does not split evenly
            # across cores) never DMA out of bounds; the in-kernel mask zeroes
            # their contribution.
            return (jnp.minimum(c * steps + i, last_block), 0)

        partial_sums = pl.pallas_call(
            kernel,
            out_shape=jax.ShapeDtypeStruct((num_cores * 8, LANES), jnp.float32),
            grid_spec=pltpu.PrefetchScalarGridSpec(
                num_scalar_prefetch=0,
                grid=(num_cores, steps),
                in_specs=[
                    pl.BlockSpec((tile_r, LANES), in_map),
                    pl.BlockSpec((tile_r, LANES), in_map),
                ],
                out_specs=pl.BlockSpec((8, LANES), lambda c, i: (c, 0)),
            ),
            compiler_params=pltpu.CompilerParams(
                dimension_semantics=("parallel", "arbitrary"),
                vmem_limit_bytes=VMEM_LIMIT_BYTES),
        )(pred2, true2)
        # TODO(synk): on v7x, verify the leading "parallel" axis actually lands on
        # both TensorCores; if not, switch it to pltpu.CORE_PARALLEL / pl.core_map.

        # single final cross-lane reduce
        total = jnp.sum(partial_sums) + tail

    if reduction == "mean":
        return total / n
    if reduction == "sum":
        return total
    # TODO(synk): reduction='none' would need an elementwise-output kernel.
    raise NotImplementedError("reduction='none' not implemented")


def _focal_loss_ref(pred, true, gamma=GAMMA, alpha=ALPHA):
    return jnp.mean(_focal_terms(pred, true, gamma, alpha))


if __name__ == "__main__":
    key = jax.random.PRNGKey(0)
    k1, k2 = jax.random.split(key)
    # NCHW inputs, small shapes: batch=2, channels=4, spatial=16x16
    pred = jax.random.normal(k1, (2, 4, 16, 16), dtype=jnp.float32)
    true = jax.random.bernoulli(k2, 0.3, (2, 4, 16, 16)).astype(jnp.float32)

    out = focal_loss(pred, true)
    jax.block_until_ready(out)

    ref = _focal_loss_ref(pred, true)
    assert jnp.allclose(out, ref, rtol=1e-5, atol=1e-6), (out, ref)
    print("KERNEL_OK")
</pallas_src>

<mosaic_0001>
module attributes {stable_mosaic.version = 11 : i64} {
  func.func @_focal_loss_kernel(%arg0: i32, %arg1: i32, %arg2: memref<16x128xf32, #tpu.memory_space<vmem>>, %arg3: memref<16x128xf32, #tpu.memory_space<vmem>>, %arg4: memref<8x128xf32, #tpu.memory_space<vmem>>) attributes {dimension_semantics = [#tpu.dimension_semantics<parallel>, #tpu.dimension_semantics<arbitrary>], iteration_bounds = array<i64: 1, 1>, scalar_prefetch = 0 : i64, scratch_operands = 0 : i64, tpu.core_type = #tpu.core_type<tc>, window_params = [{transform_indices = @transform_0, window_bounds = array<i64: 16, 128>}, {transform_indices = @transform_1, window_bounds = array<i64: 16, 128>}, {transform_indices = @transform_2, window_bounds = array<i64: 8, 128>}]} {
    %c0_i32 = arith.constant 0 : i32
    %0 = arith.cmpi eq, %arg1, %c0_i32 : i32
    %1 = arith.extui %0 : i1 to i32
    %c0_i32_0 = arith.constant 0 : i32
    %2 = arith.cmpi ne, %1, %c0_i32_0 : i32
    scf.if %2 {
      %cst_18 = arith.constant 0.000000e+00 : f32
      %44 = vector.broadcast %cst_18 : f32 to vector<8x128xf32>
      %c0_19 = arith.constant 0 : index
      %c0_20 = arith.constant 0 : index
      %45 = vector.load %arg4[%c0_19, %c0_20] : memref<8x128xf32, #tpu.memory_space<vmem>>, vector<8x128xf32>
      tpu.vector_store %arg4[%c0_19, %c0_20], %44 {strides = array<i32>} : memref<8x128xf32, #tpu.memory_space<vmem>>, vector<8x128xf32>,
    } else {
    }
    %c0 = arith.constant 0 : index
    %c0_1 = arith.constant 0 : index
    %3 = vector.load %arg2[%c0, %c0_1] : memref<16x128xf32, #tpu.memory_space<vmem>>, vector<16x128xf32>
    %c0_2 = arith.constant 0 : index
    %c0_3 = arith.constant 0 : index
    %4 = vector.load %arg3[%c0_2, %c0_3] : memref<16x128xf32, #tpu.memory_space<vmem>>, vector<16x128xf32>
    %5 = math.absf %3 : vector<16x128xf32>
    %cst = arith.constant 0.000000e+00 : f32
    %6 = vector.broadcast %cst : f32 to vector<16x128xf32>
    %7 = arith.subf %6, %5 : vector<16x128xf32>
    %8 = math.exp %7 : vector<16x128xf32>
    %cst_4 = arith.constant 0.000000e+00 : f32
    %9 = vector.broadcast %cst_4 : f32 to vector<16x128xf32>
    %10 = arith.maximumf %3, %9 : vector<16x128xf32>
    %11 = arith.mulf %3, %4 : vector<16x128xf32>
    %12 = arith.subf %10, %11 : vector<16x128xf32>
    %13 = math.log1p %8 : vector<16x128xf32>
    %14 = arith.addf %12, %13 : vector<16x128xf32>
    %cst_5 = arith.constant 1.000000e+00 : f32
    %15 = vector.broadcast %cst_5 : f32 to vector<16x128xf32>
    %16 = arith.addf %15, %8 : vector<16x128xf32>
    %cst_6 = arith.constant 1.000000e+00 : f32
    %17 = vector.broadcast %cst_6 : f32 to vector<16x128xf32>
    %18 = arith.divf %17, %16 : vector<16x128xf32>
    %cst_7 = arith.constant 0.000000e+00 : f32
    %19 = vector.broadcast %cst_7 : f32 to vector<16x128xf32>
    %20 = arith.cmpf oge, %3, %19 : vector<16x128xf32>
    %21 = arith.mulf %8, %18 : vector<16x128xf32>
    %22 = arith.select %20, %18, %21 : vector<16x128xi1>, vector<16x128xf32>
    %cst_8 = arith.constant 2.000000e+00 : f32
    %23 = vector.broadcast %cst_8 : f32 to vector<16x128xf32>
    %24 = arith.mulf %23, %22 : vector<16x128xf32>
    %cst_9 = arith.constant 1.000000e+00 : f32
    %25 = vector.broadcast %cst_9 : f32 to vector<16x128xf32>
    %26 = arith.subf %25, %24 : vector<16x128xf32>
    %27 = arith.mulf %4, %26 : vector<16x128xf32>
    %28 = arith.addf %22, %27 : vector<16x128xf32>
    %cst_10 = arith.constant 0.000000e+00 : f32
    %29 = vector.broadcast %cst_10 : f32 to vector<16x128xf32>
    %30 = arith.maximumf %28, %29 : vector<16x128xf32>
    %cst_11 = arith.constant -5.000000e-01 : f32
    %31 = vector.broadcast %cst_11 : f32 to vector<16x128xf32>
    %32 = arith.mulf %4, %31 : vector<16x128xf32>
    %cst_12 = arith.constant 7.500000e-01 : f32
    %33 = vector.broadcast %cst_12 : f32 to vector<16x128xf32>
    %34 = arith.addf %33, %32 : vector<16x128xf32>
    %35 = arith.mulf %14, %34 : vector<16x128xf32>
    %36 = math.sqrt %30 : vector<16x128xf32>
    %37 = arith.mulf %30, %36 : vector<16x128xf32>
    %38 = arith.mulf %35, %37 : vector<16x128xf32>
    %c0_13 = arith.constant 0 : index
    %c0_14 = arith.constant 0 : index
    %39 = vector.load %arg4[%c0_13, %c0_14] : memref<8x128xf32, #tpu.memory_space<vmem>>, vector<8x128xf32>
    %40 = vector.shape_cast %38 : vector<16x128xf32> to vector<2x8x128xf32>
    %cst_15 = arith.constant dense<0.000000e+00> : vector<8x128xf32>
    %41 = vector.multi_reduction <add>, %40, %cst_15 [0] : vector<2x8x128xf32> to vector<8x128xf32>
    %42 = arith.addf %39, %41 : vector<8x128xf32>
    %c0_16 = arith.constant 0 : index
    %c0_17 = arith.constant 0 : index
    %43 = vector.load %arg4[%c0_16, %c0_17] : memref<8x128xf32, #tpu.memory_space<vmem>>, vector<8x128xf32>
    tpu.vector_store %arg4[%c0_16, %c0_17], %42 {strides = array<i32>} : memref<8x128xf32, #tpu.memory_space<vmem>>, vector<8x128xf32>,
    return
  }
  func.func @transform_0(%arg0: i32, %arg1: i32) -> (i32, i32) {
    %c1_i32 = arith.constant 1 : i32
    %0 = arith.muli %arg0, %c1_i32 : i32
    %1 = arith.addi %0, %arg1 : i32
    %c0_i32 = arith.constant 0 : i32
    %2 = arith.minsi %1, %c0_i32 : i32
    %c0_i32_0 = arith.constant 0 : i32
    %c0_i32_1 = arith.constant 0 : i32
    return %2, %c0_i32_0 : i32, i32
  }
  func.func @transform_1(%arg0: i32, %arg1: i32) -> (i32, i32) {
    %c1_i32 = arith.constant 1 : i32
    %0 = arith.muli %arg0, %c1_i32 : i32
    %1 = arith.addi %0, %arg1 : i32
    %c0_i32 = arith.constant 0 : i32
    %2 = arith.minsi %1, %c0_i32 : i32
    %c0_i32_0 = arith.constant 0 : i32
    %c0_i32_1 = arith.constant 0 : i32
    return %2, %c0_i32_0 : i32, i32
  }
  func.func @transform_2(%arg0: i32, %arg1: i32) -> (i32, i32) {
    %c0_i32 = arith.constant 0 : i32
    %c0_i32_0 = arith.constant 0 : i32
    return %arg0, %c0_i32 : i32, i32
  }
}

</mosaic_0001>

<llo_original>
// kernel: tpu_custom_call.1
$region0: #{tpu_custom_call.1}
  #allocation0 [shape = 'u32[]', space=smem, size = 0x4, offset = 0x4, fixed_abs, tag = 'smem constant byte address 0x4 - core index']
  #allocation1 [shape = 'u32[144,128]{1,0:T(1,128)}', space=vmem, size = 0x12000, scoped, tag = 'internal scratch']
  %s0 = inlined_call_operand.hbm [shape: f32[16,128], index: 0, kind: input, shape index: {}]
  %s1 = inlined_call_operand.hbm [shape: f32[16,128], index: 1, kind: input, shape index: {}]
  %s2 = inlined_call_operand.hbm [shape: f32[8,128], index: 2, kind: output, shape index: {}]
  %s3 = sld [smem:[#allocation0]]
  $region30: #{tpu_custom_call.1} parent=0
    _
  %s5 = ssub.s32 1, %s3
  %s6 = scalar_select 0, %s5, %s3
  $region1: #{tpu_custom_call.1} parent=0
    #allocation2 [shape = 'u8[8192]{0}', space=vmem, size = 0x2000, scoped, tag = 'input window, operand 0, single buffered']
    #allocation3 [shape = 's32[1]{0}', space=sflag, size = 0x4, scoped, tag = 'scoped memory for tpu_custom_call.1']
    #allocation4 [shape = 's32[1]{0}', space=sflag, size = 0x4, scoped, tag = 'scoped memory for tpu_custom_call.1']
    #allocation5 [shape = 'u8[8192]{0}', space=vmem, size = 0x2000, scoped, tag = 'input window, operand 1, single buffered']
    #allocation6 [shape = 's32[1]{0}', space=sflag, size = 0x4, scoped, tag = 'scoped memory for tpu_custom_call.1']
    #allocation7 [shape = 'u8[4096]{0}', space=vmem, size = 0x1000, scoped, tag = 'output window, operand 0, single buffered']
    %7 = vsyncpa [#allocation3], 0
    %8 = vsyncpa [#allocation6], 0
    %9 = vsyncpa [#allocation4], 0
    // Predicated region
    $region2: #{tpu_custom_call.1} parent=1 // pred_check
      _
    $region3: #{tpu_custom_call.1} parent=1 // pred_check_branch
      %11 = sbr.rel (0) target = $region5
    $region4: #{tpu_custom_call.1} parent=1 // pred_region
      %s12 = sadd.s32 0, 0
      %p13 = scmp.lt.s32.totalorder %s12, 0
      %s14 = scalar_select %p13, %s12, 0
      %s15 = smul.u32 2, %s14
      %s17 = ssub.s32 256, 256
      %18 = vsyncadd [#allocation3], %s17
      %s19 = smul.addr %s15, 128
      %s20 = scalar_lea.hbm %s0, %s19
      %s21 = sshll.u32 [#allocation2], 4
      %s22 = int_to_ptr.vmem [resolvable:$true] %s21
      %27 = dma.hbm_to_vmem [thread:$0]  %s20, 256, %s22, [#allocation3], 128, 128, 8
    $region5: #{tpu_custom_call.1} parent=1 // pred_fallthru
      _
    // Predicated region
    $region6: #{tpu_custom_call.1} parent=1 // pred_check
      _
    $region7: #{tpu_custom_call.1} parent=1 // pred_check_branch
      %29 = sbr.rel (0) target = $region9
    $region8: #{tpu_custom_call.1} parent=1 // pred_region
      %s30 = sadd.s32 0, 0
      %p31 = scmp.lt.s32.totalorder %s30, 0
      %s32 = scalar_select %p31, %s30, 0
      %s33 = smul.u32 2, %s32
      %s35 = ssub.s32 256, 256
      %36 = vsyncadd [#allocation6], %s35
      %s37 = smul.addr %s33, 128
      %s38 = scalar_lea.hbm %s1, %s37
      %s39 = sshll.u32 [#allocation5], 4
      %s40 = int_to_ptr.vmem [resolvable:$true] %s39
      %45 = dma.hbm_to_vmem [thread:$0]  %s38, 256, %s40, [#allocation6], 128, 128, 8
    $region9: #{tpu_custom_call.1} parent=1 // pred_fallthru
      _
    // Predicated region
    $region10: #{tpu_custom_call.1} parent=1 // pred_check
      _
    $region11: #{tpu_custom_call.1} parent=1 // pred_check_branch
      %47 = sbr.rel (0) target = $region13
    $region12: #{tpu_custom_call.1} parent=1 // pred_region
      %48 = dma.done [#allocation3], 256
    $region13: #{tpu_custom_call.1} parent=1 // pred_fallthru
      _
    // Predicated region
    $region14: #{tpu_custom_call.1} parent=1 // pred_check
      _
    $region15: #{tpu_custom_call.1} parent=1 // pred_check_branch
      %50 = sbr.rel (0) target = $region17
    $region16: #{tpu_custom_call.1} parent=1 // pred_region
      %51 = dma.done [#allocation6], 256
    $region17: #{tpu_custom_call.1} parent=1 // pred_fallthru
      _
    %s52 = sadd.s32 0, 0
    %p53 = scmp.lt.s32.totalorder %s52, 0
    %s54 = scalar_select %p53, %s52, 0
    %s55 = smul.u32 2, %s54
    %s56 = sadd.s32 0, 0
    %p57 = scmp.lt.s32.totalorder %s56, 0
    %s58 = scalar_select %p57, %s56, 0
    %s59 = smul.u32 2, %s58
    %p60 = scmp.eq.s32.totalorder 0, 0
    // Predicated region
    $region18: #{tpu_custom_call.1} parent=1 // pred_check
      %p61 = pneg %p60
    $region19: #{tpu_custom_call.1} parent=1 // pred_check_branch
      %63 = sbr.rel (%p61) target = $region21
    $region20: #{tpu_custom_call.1} parent=1 // pred_region
      %64 = vst [vmem:[#allocation7] sm:$0xff] 0.0
    $region21: #{tpu_custom_call.1} parent=1 // pred_fallthru
      _
    %v65 = vld [vmem:[#allocation2] sm:$0xff]
    %v66 = vld [vmem:[#allocation2 + $0x8] sm:$0xff]
    %v67 = vld [vmem:[#allocation5] sm:$0xff]
    %v68 = vld [vmem:[#allocation5 + $0x8] sm:$0xff]
    %v69 = vand.u32 2147483647, %v65
    %v70 = vand.u32 2147483647, %v66
    %v71 = vsub.f32 0.0, %v69
    %v72 = vsub.f32 0.0, %v70
    %v73 = vmul.f32 %v71, 1.442695
    %v74 = vpow.pop %v73
    %v75 = vmul.f32 %v72, 1.442695
    %v76 = vpow.pop %v75
    %v77 = vmax.f32 %v65, 0.0
    %v78 = vmax.f32 %v66, 0.0
    %v79 = vmul.f32 %v65, %v67
    %v80 = vmul.f32 %v66, %v68
    %v81 = vsub.f32 %v77, %v79
    %v82 = vsub.f32 %v78, %v80
    %v83 = vadd.f32 %v74, 1.0
    %v84 = vlog2.pop %v83
    %v85 = vmul.f32 %v84, 0.6931472
    %v86 = vmul.f32 -0.5, %v74
    %v87 = vadd.f32 %v86, 1.0
    %v88 = vmul.f32 %v87, %v74
    %v89 = vand.u32 2147483647, %v74
    %vm90 = vcmp.lt.f32.partialorder %v89, 0.0004427343
    %v91 = vsel %vm90, %v88, %v85
    %v92 = vadd.f32 %v76, 1.0
    %v93 = vlog2.pop %v92
    %v94 = vmul.f32 %v93, 0.6931472
    %v95 = vmul.f32 -0.5, %v76
    %v96 = vadd.f32 %v95, 1.0
    %v97 = vmul.f32 %v96, %v76
    %v98 = vand.u32 2147483647, %v76
    %vm99 = vcmp.lt.f32.partialorder %v98, 0.0004427343
    %v100 = vsel %vm99, %v97, %v94
    %v101 = vadd.f32 %v81, %v91
    %v102 = vadd.f32 %v82, %v100
    %v103 = vadd.f32 %v74, 1.0
    %v104 = vadd.f32 %v76, 1.0
    %v105 = vrcp.pop %v103
    %v106 = vmul.f32 1.0, %v105
    %v107 = vrcp.pop %v104
    %v108 = vmul.f32 1.0, %v107
    %vm109 = vcmp.ge.f32.partialorder %v65, 0.0
    %vm110 = vcmp.ge.f32.partialorder %v66, 0.0
    %v111 = vmul.f32 %v74, %v106
    %v112 = vmul.f32 %v76, %v108
    %v113 = vsel %vm109, %v106, %v111
    %v114 = vsel %vm110, %v108, %v112
    %v115 = vmul.f32 %v113, 2.0
    %v116 = vmul.f32 %v114, 2.0
    %v117 = vsub.f32 1.0, %v115
    %v118 = vsub.f32 1.0, %v116
    %v119 = vmul.f32 %v67, %v117
    %v120 = vmul.f32 %v68, %v118
    %v121 = vadd.f32 %v113, %v119
    %v122 = vadd.f32 %v114, %v120
    %v123 = vmax.f32 %v121, 0.0
    %v124 = vmax.f32 %v122, 0.0
    %v125 = vmul.f32 %v67, -0.5
    %v126 = vmul.f32 %v68, -0.5
    %v127 = vadd.f32 %v125, 0.75
    %v128 = vadd.f32 %v126, 0.75
    %v129 = vmul.f32 %v101, %v127
    %v130 = vmul.f32 %v102, %v128
    %v131 = vrsqrt.pop %v123
    %v132 = vmul.f32 %v123, %v131
    %vm133 = vcmp.eq.f32.partialorder %v123, inf
    %v134 = vsel %vm133, %v123, %v132
    %vm135 = vcmp.eq.f32.partialorder %v123, 0.0
    %v136 = vand.u32 %v123, 2147483648
    %v137 = vsel %vm135, %v136, %v134
    %v138 = vrsqrt.pop %v124
    %v139 = vmul.f32 %v124, %v138
    %vm140 = vcmp.eq.f32.partialorder %v124, inf
    %v141 = vsel %vm140, %v124, %v139
    %vm142 = vcmp.eq.f32.partialorder %v124, 0.0
    %v143 = vand.u32 %v124, 2147483648
    %v144 = vsel %vm142, %v143, %v141
    %v145 = vmul.f32 %v123, %v137
    %v146 = vmul.f32 %v124, %v144
    %v147 = vmul.f32 %v129, %v145
    %v148 = vmul.f32 %v130, %v146
    %v149 = vld [vmem:[#allocation7] sm:$0xff]
    %v150 = vadd.f32 %v147, %v148
    %v151 = vadd.f32 %v149, %v150
    %152 = vst [vmem:[#allocation7] sm:$0xff] %v151
    // Predicated region
    $region22: #{tpu_custom_call.1} parent=1 // pred_check
      _
    $region23: #{tpu_custom_call.1} parent=1 // pred_check_branch
      %154 = sbr.rel (0) target = $region25
    $region24: #{tpu_custom_call.1} parent=1 // pred_region
      %s156 = ssub.s32 128, 128
      %157 = vsyncadd [#allocation4], %s156
      %s159 = sshll.u32 [#allocation7], 4
      %s160 = int_to_ptr.vmem [resolvable:$true] %s159
      %162 = dma.vmem_to_hbm [thread:$0]  %s160, 128, %s2, [#allocation4]
    $region25: #{tpu_custom_call.1} parent=1 // pred_fallthru
      _
    // Predicated region
    $region26: #{tpu_custom_call.1} parent=1 // pred_check
      _
    $region27: #{tpu_custom_call.1} parent=1 // pred_check_branch
      %164 = sbr.rel (0) target = $region29
    $region28: #{tpu_custom_call.1} parent=1 // pred_region
      %165 = dma.done [#allocation4], 128
    $region29: #{tpu_custom_call.1} parent=1 // pred_fallthru
      _
    %166 = vsyncpa [#allocation3], 1
    %167 = vsyncpa [#allocation6], 1
    %168 = vsyncpa [#allocation4], 1

</llo_original>
